<compile_context>
chip_gen: v6e
topology: v6e:2x2x1
jax: 0.10.0
libtpu: 0.0.40
codegen_flags: <defaults>
</compile_context>

<pallas_src>
import math

import jax
import jax.numpy as jnp
from jax.experimental import pallas as pl
from jax.experimental.pallas import tpu as pltpu


def _vmem_budgets():
    """(scoped vmem_limit_bytes, per-block working-set budget) by TPU generation."""
    try:
        cap = pltpu.get_tpu_info().vmem_capacity_bytes
    except Exception:
        cap = None
    if cap is not None and cap >= 96 * 1024 * 1024:
        # v5e / v6e: 128 MiB physical VMEM -> raise the scoped limit and block budget.
        return 64 * 1024 * 1024, 48 * 1024 * 1024
    # v7x (64 MiB per-TC) or unknown: stay conservative.
    return 32 * 1024 * 1024, 24 * 1024 * 1024


def _choose_tile_o(O, N, itemsize, block_budget):
    """Output-channel tile size: packed-sublane aligned, VMEM-bounded, >=2 blocks."""
    # Packed sublane multiple: 8 for f32, 16 for bf16, 32 for 8-bit dtypes.
    sub = max(8, 32 // itemsize)
    # Per-row working set: double-buffered input + output blocks in the NATIVE dtype
    # plus ~2 full-width f32 temporaries created in-kernel.
    per_row_bytes = 4 * itemsize * N + 8 * N
    max_rows = max(sub, (block_budget // max(per_row_bytes, 1)) // sub * sub)

    if O <= sub:
        # Cannot split below the sublane alignment: one full-extent block.
        return O

    # Aim for an even number of blocks >= 2 so the "parallel" grid axis feeds both
    # v7x TensorCores; otherwise take the biggest VMEM-fitting, aligned tile.
    target_blocks = max(2, -(-O // max_rows))
    if target_blocks % 2:
        target_blocks += 1
    rows = -(-O // target_blocks)            # ceil(O / target_blocks)
    to = -(-rows // sub) * sub               # round up to the sublane multiple
    return max(sub, min(to, O, max_rows))
    # TODO(synk): for pathological N (huge linear layers) where even TO=sub exceeds
    # the budget, add a second "arbitrary" grid axis over N with sum accumulators;
    # conv weight shapes never get there.


def _make_lsq_plus_weight_kernel(n_valid, qn, qp, inv_div):
    """Returns a kernel closed over the static constants."""
    inv_n = 1.0 / n_valid
    inv_nm1 = 1.0 / max(n_valid - 1.0, 1.0)   # unbiased (torch.std default)

    def kernel(w_ref, out_ref, scale_ref):
        # ---- per-channel statistics (two-pass, f32) over the lane axis ----
        w = w_ref[...].astype(jnp.float32)                       # [TO, N]
        mean = jnp.sum(w, axis=1, keepdims=True) * inv_n          # [TO, 1]
        d = w - mean
        var = jnp.sum(d * d, axis=1, keepdims=True) * inv_nm1     # unbiased
        std = jnp.sqrt(var)
        # max(|mean - 3 std|, |mean + 3 std|) == |mean| + 3 std  (std >= 0)
        scale = (jnp.abs(mean) + 3.0 * std) * inv_div             # [TO, 1]
        scale_ref[...] = scale.astype(scale_ref.dtype)
        # TODO(synk): an all-zero channel gives scale=0 -> NaN output for that row,
        # exactly like the PyTorch reference (div by 0); no epsilon added on purpose.

        # ---- quantize / dequantize (diff_bit == 0 since i_bit == bit_list[-1]) ----
        # Re-read the VMEM-resident native-dtype block (vld slots are idle in this
        # HBM-bound kernel) instead of keeping the f32 copy live across the reduction
        # barrier; exact divide keeps bit parity with torch.div round-half-to-even.
        w2 = w_ref[...].astype(jnp.float32)
        q = jnp.clip(jnp.round(w2 / scale), qn, qp)
        out_ref[...] = (q * scale).astype(out_ref.dtype)

    return kernel


def lsq_plus_weight_quantizer(weight, bit_list, signed=True):
    """Forward pass of LSQPlusWeightQuantizer (training, init_state == 0, per-channel).

    Args:
      weight: [O, I, kH, kW] conv weight (OIHW), f32 or bf16.
      bit_list: list of bit-widths; wbit = bit_list[-1].
      signed: signed quantization range.

    Returns:
      (dequantized weight [O, I, kH, kW] in weight.dtype, per-channel scale [O] f32)
    """
    wbit = bit_list[-1]
    assert wbit <= 8
    if signed:
        if wbit != 1:
            Qn, Qp = -(1 << (wbit - 1)), (1 << (wbit - 1)) - 1
        else:
            Qn, Qp = -1, 1
    else:
        Qn, Qp = 0, (1 << wbit) - 1
    inv_div = 1.0 / float(2 ** (wbit - 1))

    O = weight.shape[0]
    N = math.prod(weight.shape[1:])
    itemsize = jnp.dtype(weight.dtype).itemsize
    w2d = weight.reshape(O, N)            # keep native dtype; no wrapper-side upcast

    vmem_limit, block_budget = _vmem_budgets()
    TO = _choose_tile_o(O, N, itemsize, block_budget)
    grid = (pl.cdiv(O, TO),)

    kernel = _make_lsq_plus_weight_kernel(float(N), float(Qn), float(Qp), inv_div)

    cost = pl.CostEstimate(
        flops=10 * O * N,                               # stats + quant/dequant chain
        transcendentals=O,                              # per-channel sqrt
        bytes_accessed=2 * O * N * itemsize + 4 * O,    # weight in + out + scale
    )

    out2d, scale = pl.pallas_call(
        kernel,
        out_shape=(
            jax.ShapeDtypeStruct((O, N), weight.dtype),
            jax.ShapeDtypeStruct((O, 1), jnp.float32),
        ),
        grid_spec=pltpu.PrefetchScalarGridSpec(
            num_scalar_prefetch=0,
            grid=grid,
            in_specs=[pl.BlockSpec((TO, N), lambda i: (i, 0))],
            out_specs=[
                pl.BlockSpec((TO, N), lambda i: (i, 0)),
                # (TO, 1) is a lane-width-1 store; traffic is tiny so left as-is.
                pl.BlockSpec((TO, 1), lambda i: (i, 0)),
            ],
        ),
        compiler_params=pltpu.CompilerParams(
            # Per-channel work is fully independent across O: parallel grid axis
            # (sharded across TensorCores on v7x; harmless on v5e/v6e).
            dimension_semantics=("parallel",),
            vmem_limit_bytes=vmem_limit,
        ),
        cost_estimate=cost,
    )(w2d)

    return out2d.reshape(weight.shape), scale.reshape(O)


def _reference(weight, bit_list, signed=True):
    """Pure-JAX reference matching the PyTorch forward (two-pass std, division)."""
    wbit = bit_list[-1]
    if signed:
        Qn, Qp = (-(1 << (wbit - 1)), (1 << (wbit - 1)) - 1) if wbit != 1 else (-1, 1)
    else:
        Qn, Qp = 0, (1 << wbit) - 1
    div = 2.0 ** (wbit - 1)
    O = weight.shape[0]
    w2d = weight.reshape(O, -1).astype(jnp.float32)
    mean = jnp.mean(w2d, axis=1)
    std = jnp.std(w2d, axis=1, ddof=1)
    clip_range = jnp.maximum(jnp.abs(mean - 3.0 * std), jnp.abs(mean + 3.0 * std))
    scale = (clip_range / div).reshape((O,) + (1,) * (weight.ndim - 1))
    q = jnp.clip(jnp.round(weight.astype(jnp.float32) / scale), Qn, Qp)
    return (q * scale).astype(weight.dtype), scale.reshape(O)


def _validate(weight, bit_list, out, scale):
    wbit = bit_list[-1]
    Qn, Qp = -(1 << (wbit - 1)), (1 << (wbit - 1)) - 1
    O = weight.shape[0]
    w2d = weight.reshape(O, -1).astype(jnp.float32)

    assert out.shape == weight.shape and out.dtype == weight.dtype
    assert scale.shape == (O,) and scale.dtype == jnp.float32

    ref_out, ref_scale = _reference(weight, bit_list, signed=True)

    # 1) per-channel scale matches the two-pass torch-style reference.
    assert jnp.allclose(scale, ref_scale, rtol=1e-5, atol=1e-7), "scale mismatch"

    # 2) quant/dequant pipeline is consistent given the kernel's own per-channel scale.
    dq = (jnp.clip(jnp.round(w2d / scale[:, None]), Qn, Qp)
          * scale[:, None]).astype(weight.dtype)
    assert jnp.allclose(dq.astype(jnp.float32),
                        out.reshape(O, -1).astype(jnp.float32),
                        rtol=1e-3, atol=1e-5), "dequant mismatch"

    # 3) end-to-end result within one quantization step of the full reference
    #    (guards against a rounding tie flipping under sub-ulp scale differences).
    diff = jnp.abs(out.astype(jnp.float32) - ref_out.astype(jnp.float32))
    bound = scale.reshape((O,) + (1,) * (weight.ndim - 1)) * 1.01
    assert jnp.all(diff <= bound), "dequant too far from reference"


if __name__ == "__main__":
    key = jax.random.PRNGKey(0)
    k1, k2, k3 = jax.random.split(key, 3)
    bit_list = [2, 4]  # wbit = 4 -> Qn = -8, Qp = 7
    # TODO(synk): the diff_bit (`>>`) path only activates when i_bit < bit_list[-1];
    # the module's forward always calls with i_bit == bit_list[-1], so it is a no-op.

    # 1) Small conv weight (OIHW), single full-extent block path.
    w_a = 0.1 * jax.random.normal(k1, (4, 4, 3, 3), dtype=jnp.float32)
    out_a, s_a = lsq_plus_weight_quantizer(w_a, bit_list, signed=True)
    jax.block_until_ready((out_a, s_a))
    _validate(w_a, bit_list, out_a, s_a)

    # 2) Larger O, f32: tiled grid with >= 2 blocks (megacore-shardable on v7x).
    w_b = 0.05 * jax.random.normal(k2, (32, 8, 3, 3), dtype=jnp.float32)
    out_b, s_b = lsq_plus_weight_quantizer(w_b, bit_list, signed=True)
    jax.block_until_ready((out_b, s_b))
    _validate(w_b, bit_list, out_b, s_b)

    # 3) bf16 weights: native-dtype I/O, 16-row packed-sublane tiles, tiled grid.
    w_c = (0.05 * jax.random.normal(k3, (32, 4, 3, 3), dtype=jnp.float32)
           ).astype(jnp.bfloat16)
    out_c, s_c = lsq_plus_weight_quantizer(w_c, bit_list, signed=True)
    jax.block_until_ready((out_c, s_c))
    _validate(w_c, bit_list, out_c, s_c)

    print("KERNEL_OK")
</pallas_src>

<mosaic_0001>
module attributes {stable_mosaic.version = 11 : i64} {
  func.func @kernel(%arg0: i32, %arg1: memref<4x36xf32, #tpu.memory_space<vmem>>, %arg2: memref<4x36xf32, #tpu.memory_space<vmem>>, %arg3: memref<4x1xf32, #tpu.memory_space<vmem>>) attributes {dimension_semantics = [#tpu.dimension_semantics<parallel>], iteration_bounds = array<i64: 1>, scalar_prefetch = 0 : i64, scratch_operands = 0 : i64, tpu.core_type = #tpu.core_type<tc>, window_params = [{transform_indices = @transform_0, window_bounds = array<i64: 4, 36>}, {transform_indices = @transform_1, window_bounds = array<i64: 4, 36>}, {transform_indices = @transform_2, window_bounds = array<i64: 4, 1>}]} {
    %c0 = arith.constant 0 : index
    %c0_0 = arith.constant 0 : index
    %0 = vector.load %arg1[%c0, %c0_0] : memref<4x36xf32, #tpu.memory_space<vmem>>, vector<4x36xf32>
    %cst = arith.constant dense<0.000000e+00> : vector<4xf32>
    %1 = vector.multi_reduction <add>, %0, %cst [1] : vector<4x36xf32> to vector<4xf32>
    %2 = vector.shape_cast %1 : vector<4xf32> to vector<4x1xf32>
    %cst_1 = arith.constant 0.027777778 : f32
    %3 = vector.broadcast %cst_1 : f32 to vector<4x1xf32>
    %4 = arith.mulf %2, %3 : vector<4x1xf32>
    %5 = vector.broadcast %4 : vector<4x1xf32> to vector<4x36xf32>
    %6 = arith.subf %0, %5 : vector<4x36xf32>
    %7 = arith.mulf %6, %6 : vector<4x36xf32>
    %cst_2 = arith.constant dense<0.000000e+00> : vector<4xf32>
    %8 = vector.multi_reduction <add>, %7, %cst_2 [1] : vector<4x36xf32> to vector<4xf32>
    %9 = vector.shape_cast %8 : vector<4xf32> to vector<4x1xf32>
    %cst_3 = arith.constant 0.0285714287 : f32
    %10 = vector.broadcast %cst_3 : f32 to vector<4x1xf32>
    %11 = arith.mulf %9, %10 : vector<4x1xf32>
    %12 = math.sqrt %11 : vector<4x1xf32>
    %13 = math.absf %4 : vector<4x1xf32>
    %cst_4 = arith.constant 3.000000e+00 : f32
    %14 = vector.broadcast %cst_4 : f32 to vector<4x1xf32>
    %15 = arith.mulf %14, %12 : vector<4x1xf32>
    %16 = arith.addf %13, %15 : vector<4x1xf32>
    %cst_5 = arith.constant 1.250000e-01 : f32
    %17 = vector.broadcast %cst_5 : f32 to vector<4x1xf32>
    %18 = arith.mulf %16, %17 : vector<4x1xf32>
    %c0_6 = arith.constant 0 : index
    %c0_7 = arith.constant 0 : index
    %19 = vector.load %arg3[%c0_6, %c0_7] : memref<4x1xf32, #tpu.memory_space<vmem>>, vector<4x1xf32>
    tpu.vector_store %arg3[%c0_6, %c0_7], %18 {strides = array<i32>} : memref<4x1xf32, #tpu.memory_space<vmem>>, vector<4x1xf32>,
    %c0_8 = arith.constant 0 : index
    %c0_9 = arith.constant 0 : index
    %20 = vector.load %arg1[%c0_8, %c0_9] : memref<4x36xf32, #tpu.memory_space<vmem>>, vector<4x36xf32>
    %21 = vector.broadcast %18 : vector<4x1xf32> to vector<4x36xf32>
    %22 = arith.divf %20, %21 : vector<4x36xf32>
    %23 = math.roundeven %22 : vector<4x36xf32>
    %cst_10 = arith.constant -8.000000e+00 : f32
    %cst_11 = arith.constant 7.000000e+00 : f32
    %24 = vector.broadcast %cst_10 : f32 to vector<4x36xf32>
    %25 = arith.maximumf %24, %23 : vector<4x36xf32>
    %26 = vector.broadcast %cst_11 : f32 to vector<4x36xf32>
    %27 = arith.minimumf %26, %25 : vector<4x36xf32>
    %28 = vector.broadcast %18 : vector<4x1xf32> to vector<4x36xf32>
    %29 = arith.mulf %27, %28 : vector<4x36xf32>
    %c0_12 = arith.constant 0 : index
    %c0_13 = arith.constant 0 : index
    %30 = vector.load %arg2[%c0_12, %c0_13] : memref<4x36xf32, #tpu.memory_space<vmem>>, vector<4x36xf32>
    tpu.vector_store %arg2[%c0_12, %c0_13], %29 {strides = array<i32>} : memref<4x36xf32, #tpu.memory_space<vmem>>, vector<4x36xf32>,
    return
  }
  func.func @transform_0(%arg0: i32) -> (i32, i32) {
    %c0_i32 = arith.constant 0 : i32
    %c0_i32_0 = arith.constant 0 : i32
    return %arg0, %c0_i32 : i32, i32
  }
  func.func @transform_1(%arg0: i32) -> (i32, i32) {
    %c0_i32 = arith.constant 0 : i32
    %c0_i32_0 = arith.constant 0 : i32
    return %arg0, %c0_i32 : i32, i32
  }
  func.func @transform_2(%arg0: i32) -> (i32, i32) {
    %c0_i32 = arith.constant 0 : i32
    %c0_i32_0 = arith.constant 0 : i32
    return %arg0, %c0_i32 : i32, i32
  }
}

</mosaic_0001>

<llo_original>
// kernel: tpu_custom_call.1
$region0: #{tpu_custom_call.1}
  #allocation0 [shape = 'u32[]', space=smem, size = 0x4, offset = 0x4, fixed_abs, tag = 'smem constant byte address 0x4 - core index']
  #allocation1 [shape = 'u32[144,128]{1,0:T(1,128)}', space=vmem, size = 0x12000, scoped, tag = 'internal scratch']
  %s0 = inlined_call_operand.hbm [shape: f32[4,36], index: 0, kind: input, shape index: {}]
  %s1 = inlined_call_operand.hbm [shape: f32[4,36], index: 1, kind: output, shape index: {0}]
  %s2 = inlined_call_operand.vmem [shape: f32[4,1], index: 2, kind: output, shape index: {1}]
  %3 = xla_tuple %s1, %s2
  %s4 = sld [smem:[#allocation0]]
  $region26: #{tpu_custom_call.1} parent=0
    _
  %s6 = ssub.s32 1, %s4
  %s7 = scalar_select 0, %s6, %s4
  $region1: #{tpu_custom_call.1} parent=0
    #allocation2 [shape = 'u8[2048]{0}', space=vmem, size = 0x800, scoped, tag = 'input window, operand 0, single buffered']
    #allocation3 [shape = 's32[1]{0}', space=sflag, size = 0x4, scoped, tag = 'scoped memory for tpu_custom_call.1']
    #allocation4 [shape = 's32[1]{0}', space=sflag, size = 0x4, scoped, tag = 'scoped memory for tpu_custom_call.1']
    #allocation5 [shape = 'u8[2048]{0}', space=vmem, size = 0x800, scoped, tag = 'output window, operand 0, single buffered']
    %8 = vsyncpa [#allocation3], 0
    %9 = vsyncpa [#allocation4], 0
    // Predicated region
    $region2: #{tpu_custom_call.1} parent=1 // pred_check
      _
    $region3: #{tpu_custom_call.1} parent=1 // pred_check_branch
      %11 = sbr.rel (0) target = $region5
    $region4: #{tpu_custom_call.1} parent=1 // pred_region
      %s13 = ssub.s32 64, 64
      %14 = vsyncadd [#allocation3], %s13
      %s16 = sshll.u32 [#allocation2], 4
      %s17 = int_to_ptr.vmem [resolvable:$true] %s16
      %19 = dma.hbm_to_vmem [thread:$0]  %s0, 64, %s17, [#allocation3]
    $region5: #{tpu_custom_call.1} parent=1 // pred_fallthru
      _
    // Predicated region
    $region6: #{tpu_custom_call.1} parent=1 // pred_check
      _
    $region7: #{tpu_custom_call.1} parent=1 // pred_check_branch
      %21 = sbr.rel (0) target = $region9
    $region8: #{tpu_custom_call.1} parent=1 // pred_region
      %22 = dma.done [#allocation3], 64
    $region9: #{tpu_custom_call.1} parent=1 // pred_fallthru
      _
    %v23 = vld [vmem:[#allocation2] sm:$0xf]
    %vm24 = vcmask 289792
    %v25 = vsel %vm24, %v23, 0.0
    %26 = vadd.xlane.f32.xlu0 %v25
    %v27 = vpop.xlane.xlu0 %26
    %v28 = vmul.f32 %v27, 0.027777778
    %v29 = vsub.f32 %v23, %v28
    %v30 = vmul.f32 %v29, %v29
    %v31 = vsel %vm24, %v30, 0.0
    %32 = vadd.xlane.f32.xlu0 %v31
    %v33 = vpop.xlane.xlu0 %32
    %v34 = vmul.f32 %v33, 0.028571429
    %v35 = vrsqrt.pop %v34
    %v36 = vmul.f32 %v34, %v35
    %vm37 = vcmp.eq.f32.partialorder %v34, inf
    %v38 = vsel %vm37, %v34, %v36
    %vm39 = vcmp.eq.f32.partialorder %v34, 0.0
    %v40 = vand.u32 %v34, 2147483648
    %v41 = vsel %vm39, %v40, %v38
    %v42 = vand.u32 2147483647, %v28
    %v43 = vmul.f32 %v41, 3.0
    %v44 = vadd.f32 %v42, %v43
    %v45 = vmul.f32 %v44, 0.125
    %vm46 = vcmask 3072
    %47 = vst.msk [vmem:[%s2] sm:$0xf] %vm46, %v45
    %v48 = vld [vmem:[#allocation2] sm:$0xf]
    %v49 = vrcp.pop %v45
    %v50 = vmul.f32 %v48, %v49
    %v51 = vround.ne.pseudo %v50
    %v52 = vmax.f32 %v51, -8.0
    %v53 = vmin.f32 %v52, 7.0
    %v54 = vmul.f32 %v53, %v45
    %55 = vst.msk [vmem:[#allocation5] sm:$0xf] %vm24, %v54
    // Predicated region
    $region10: #{tpu_custom_call.1} parent=1 // pred_check
      _
    $region11: #{tpu_custom_call.1} parent=1 // pred_check_branch
      %57 = sbr.rel (0) target = $region13
    $region12: #{tpu_custom_call.1} parent=1 // pred_region
      %s59 = ssub.s32 64, 64
      %60 = vsyncadd [#allocation4], %s59
      %s62 = sshll.u32 [#allocation5], 4
      %s63 = int_to_ptr.vmem [resolvable:$true] %s62
      %65 = dma.vmem_to_hbm [thread:$0]  %s63, 64, %s1, [#allocation4]
    $region13: #{tpu_custom_call.1} parent=1 // pred_fallthru
      _
    // Predicated region
    $region14: #{tpu_custom_call.1} parent=1 // pred_check
      _
    $region15: #{tpu_custom_call.1} parent=1 // pred_check_branch
      %67 = sbr.rel (0) target = $region17
    $region16: #{tpu_custom_call.1} parent=1 // pred_region
      _
    $region17: #{tpu_custom_call.1} parent=1 // pred_fallthru
      _
    // Predicated region
    $region18: #{tpu_custom_call.1} parent=1 // pred_check
      _
    $region19: #{tpu_custom_call.1} parent=1 // pred_check_branch
      %69 = sbr.rel (0) target = $region21
    $region20: #{tpu_custom_call.1} parent=1 // pred_region
      %70 = dma.done [#allocation4], 64
    $region21: #{tpu_custom_call.1} parent=1 // pred_fallthru
      _
    // Predicated region
    $region22: #{tpu_custom_call.1} parent=1 // pred_check
      _
    $region23: #{tpu_custom_call.1} parent=1 // pred_check_branch
      %72 = sbr.rel (0) target = $region25
    $region24: #{tpu_custom_call.1} parent=1 // pred_region
      _
    $region25: #{tpu_custom_call.1} parent=1 // pred_fallthru
      _
    %73 = vsyncpa [#allocation3], 1
    %74 = vsyncpa [#allocation4], 1

</llo_original>
